<compile_context>
chip_gen: v5e
topology: v5e:2x2
jax: 0.10.0
libtpu: 0.0.40
codegen_flags: <defaults>
</compile_context>

<pallas_src>
import numpy as np
import jax
import jax.numpy as jnp
from jax import lax
from jax.experimental import pallas as pl
from jax.experimental.pallas import tpu as pltpu

EPS = 1e-5
VMEM_LIMIT_BYTES = 32 * 1024 * 1024   # safe on v5e/v6e (128 MiB) and v7x (64 MiB)


# ----------------------------- kernel helpers -------------------------------

def _conv_3x3_taps(x_act, wk_ref, H, W, C):
    """3x3 conv of one activated, reflect-padded image held in VMEM.

    x_act : (H+2, (W+2)*C) f32 value; lanes hold the interleaved (w, c) axis.
    wk_ref: (9, W*C, W*C) block-diagonal tap weights (kron(I_W, w_tap)).
    Returns the (H, W*C) f32 conv output tile (pre-normalization).
    """
    WC = W * C
    acc = jnp.zeros((H, WC), dtype=jnp.float32)
    for dh in range(3):
        for dw in range(3):
            sl = x_act[dh:dh + H, dw * C:dw * C + WC]            # (H, W*C)
            acc = acc + jnp.dot(sl, wk_ref[dh * 3 + dw],
                                preferred_element_type=jnp.float32)
    return acc


def _partial_channel_stats(acc, sel_ref):
    """Per-channel [sum, sum-of-squares] of one (H, W*C) tile -> (2, C)."""
    colsum = jnp.sum(acc, axis=0, keepdims=True)                 # (1, W*C)
    colsq = jnp.sum(acc * acc, axis=0, keepdims=True)            # (1, W*C)
    s = jnp.dot(colsum, sel_ref[...], preferred_element_type=jnp.float32)
    sq = jnp.dot(colsq, sel_ref[...], preferred_element_type=jnp.float32)
    return jnp.concatenate([s, sq], axis=0)                      # (2, C)


# ------------------------------- kernels -------------------------------------

def _make_conv_stats_kernel(H, W, C):
    # conv1 on the padded input tile + per-image BN1 partial sums.
    def kernel(xp_ref, wk_ref, sel_ref, y_ref, st_ref):
        x = xp_ref[0]                                            # (H+2, (W+2)*C)
        acc = _conv_3x3_taps(x, wk_ref, H, W, C)
        y_ref[0] = acc
        st_ref[0] = _partial_channel_stats(acc, sel_ref)
    return kernel


def _make_bnrelu_conv_stats_kernel(H, W, C):
    # BN1-apply + ReLU (on the padded raw conv1 output; padding commutes with the
    # per-channel affine+ReLU) + conv2 + per-image BN2 partial sums.
    def kernel(yp_ref, wk_ref, sel_ref, sc_ref, sh_ref, y_ref, st_ref):
        y_pad = yp_ref[0]                                        # (H+2, (W+2)*C)
        h = jnp.maximum(y_pad * sc_ref[...] + sh_ref[...], 0.0)
        acc = _conv_3x3_taps(h, wk_ref, H, W, C)
        y_ref[0] = acc
        st_ref[0] = _partial_channel_stats(acc, sel_ref)
    return kernel


def _make_bn_residual_kernel():
    # BN2-apply + residual add.
    def kernel(y_ref, x_ref, sc_ref, sh_ref, o_ref):
        o_ref[0] = x_ref[0] + y_ref[0] * sc_ref[...] + sh_ref[...]
    return kernel


# ------------------------------ JAX-side glue ---------------------------------

def _pad_reflect_flat(x_nhwc):
    """Reflect-pad by 1 and flatten (W+2, C) onto the lane axis: [N, H+2, (W+2)*C]."""
    N, H, W, C = x_nhwc.shape
    xp = jnp.pad(x_nhwc, ((0, 0), (1, 1), (1, 1), (0, 0)), mode="reflect")
    return xp.reshape(N, H + 2, (W + 2) * C)


def _blockdiag_tap_weights(w_oihw, W):
    """PyTorch conv weight [O, I, 3, 3] -> 9 block-diagonal taps [9, W*I, W*O]."""
    eye_w = jnp.eye(W, dtype=jnp.float32)
    taps = []
    for dh in range(3):
        for dw in range(3):
            w_io = w_oihw[:, :, dh, dw].T.astype(jnp.float32)    # (I, O)
            taps.append(jnp.kron(eye_w, w_io))                    # (W*I, W*O)
    return jnp.stack(taps, axis=0)


def _bn_scale_shift(stats, gamma, beta, m):
    """Reduce per-image [sum, sumsq] partials -> per-channel scale/shift (f32)."""
    s = jnp.sum(stats, axis=0)                                   # (2, C)
    mean = s[0] / m
    var = jnp.maximum(s[1] / m - mean * mean, 0.0)               # biased variance
    scale = gamma * lax.rsqrt(var + EPS)
    shift = beta - mean * scale
    return scale, shift


def resnet_block_forward(x_nchw, params):
    x = jnp.transpose(x_nchw, (0, 2, 3, 1)).astype(jnp.float32)  # NHWC
    N, H, W, C = x.shape
    Hp, Wp = H + 2, W + 2
    WC, WpC = W * C, Wp * C
    M = N * H * W

    wk1 = _blockdiag_tap_weights(params["w1"], W)                # (9, WC, WC)
    wk2 = _blockdiag_tap_weights(params["w2"], W)
    sel = jnp.tile(jnp.eye(C, dtype=jnp.float32), (W, 1))        # (WC, C)

    img_spec = pl.BlockSpec((1, Hp, WpC), lambda n: (n, 0, 0))
    y_spec = pl.BlockSpec((1, H, WC), lambda n: (n, 0, 0))
    st_spec = pl.BlockSpec((1, 2, C), lambda n: (n, 0, 0))
    wk_spec = pl.BlockSpec((9, WC, WC), lambda n: (0, 0, 0))
    sel_spec = pl.BlockSpec((WC, C), lambda n: (0, 0))
    vpad_spec = pl.BlockSpec((1, WpC), lambda n: (0, 0))
    vout_spec = pl.BlockSpec((1, WC), lambda n: (0, 0))

    cparams = pltpu.CompilerParams(
        dimension_semantics=("parallel",),
        vmem_limit_bytes=VMEM_LIMIT_BYTES)

    conv_cost = pl.CostEstimate(
        flops=2 * N * H * WC * WC * 9,
        transcendentals=0,
        bytes_accessed=4 * (N * Hp * WpC + 9 * WC * WC + WC * C
                            + N * H * WC + N * 2 * C))

    # Stage 1: reflect-pad (JAX) -> conv1 + per-image BN1 partial sums.
    xp1 = _pad_reflect_flat(x)
    y1, st1 = pl.pallas_call(
        _make_conv_stats_kernel(H, W, C),
        grid=(N,),
        in_specs=[img_spec, wk_spec, sel_spec],
        out_specs=(y_spec, st_spec),
        out_shape=(jax.ShapeDtypeStruct((N, H, WC), jnp.float32),
                   jax.ShapeDtypeStruct((N, 2, C), jnp.float32)),
        compiler_params=cparams,
        cost_estimate=conv_cost,
    )(xp1, wk1, sel)

    # Finalize BN1 (training-mode batch statistics over all N*H*W positions).
    sc1, sh1 = _bn_scale_shift(st1, params["gamma1"], params["beta1"], M)

    # Stage 2: reflect-pad raw conv1 output, then fused BN1-apply + ReLU + conv2
    # + per-image BN2 partial sums (pad commutes with the per-channel affine+ReLU).
    y1p = _pad_reflect_flat(y1.reshape(N, H, W, C))
    sc1p = jnp.tile(sc1, Wp).reshape(1, WpC)
    sh1p = jnp.tile(sh1, Wp).reshape(1, WpC)
    y2, st2 = pl.pallas_call(
        _make_bnrelu_conv_stats_kernel(H, W, C),
        grid=(N,),
        in_specs=[img_spec, wk_spec, sel_spec, vpad_spec, vpad_spec],
        out_specs=(y_spec, st_spec),
        out_shape=(jax.ShapeDtypeStruct((N, H, WC), jnp.float32),
                   jax.ShapeDtypeStruct((N, 2, C), jnp.float32)),
        compiler_params=cparams,
        cost_estimate=conv_cost,
    )(y1p, wk2, sel, sc1p, sh1p)

    # Stage 3: BN2-apply + residual add.
    sc2, sh2 = _bn_scale_shift(st2, params["gamma2"], params["beta2"], M)
    sc2t = jnp.tile(sc2, W).reshape(1, WC)
    sh2t = jnp.tile(sh2, W).reshape(1, WC)
    x_res = x.reshape(N, H, WC)

    out = pl.pallas_call(
        _make_bn_residual_kernel(),
        grid=(N,),
        in_specs=[y_spec, y_spec, vout_spec, vout_spec],
        out_specs=y_spec,
        out_shape=jax.ShapeDtypeStruct((N, H, WC), jnp.float32),
        compiler_params=cparams,
        cost_estimate=pl.CostEstimate(flops=3 * N * H * WC, transcendentals=0,
                                      bytes_accessed=4 * (3 * N * H * WC + 2 * WC)),
    )(y2, x_res, sc2t, sh2t)

    return jnp.transpose(out.reshape(N, H, W, C), (0, 3, 1, 2))   # NCHW


# --------------------------- pure-JAX reference ------------------------------

def ref_forward(x_nchw, params):
    x = jnp.transpose(x_nchw, (0, 2, 3, 1)).astype(jnp.float32)

    def conv3x3(inp, w):
        xp = jnp.pad(inp, ((0, 0), (1, 1), (1, 1), (0, 0)), mode="reflect")
        wk = jnp.transpose(w, (2, 3, 1, 0))  # HWIO
        return lax.conv_general_dilated(
            xp, wk, (1, 1), "VALID",
            dimension_numbers=("NHWC", "HWIO", "NHWC"))

    def bn(y, g, b):
        mean = jnp.mean(y, axis=(0, 1, 2), keepdims=True)
        var = jnp.mean(jnp.square(y - mean), axis=(0, 1, 2), keepdims=True)
        return (y - mean) * lax.rsqrt(var + EPS) * g + b

    h = jnp.maximum(bn(conv3x3(x, params["w1"]), params["gamma1"], params["beta1"]), 0.0)
    o = x + bn(conv3x3(h, params["w2"]), params["gamma2"], params["beta2"])
    return jnp.transpose(o, (0, 3, 1, 2))


# ---------------------------------- main -------------------------------------

if __name__ == "__main__":
    key = jax.random.PRNGKey(0)
    N, C, H, W = 2, 4, 16, 16

    k_x, k_w1, k_w2 = jax.random.split(key, 3)
    x = jax.random.normal(k_x, (N, C, H, W), dtype=jnp.float32)

    # Conv bias unused (use_bias=False); BN affine init matches PyTorch defaults
    # (gamma=1, beta=0).
    # TODO(synk): dropout (use_dropout=True path) not implemented; default is False.
    params = {
        "w1": 0.1 * jax.random.normal(k_w1, (C, C, 3, 3), dtype=jnp.float32),
        "w2": 0.1 * jax.random.normal(k_w2, (C, C, 3, 3), dtype=jnp.float32),
        "gamma1": jnp.ones((C,), jnp.float32),
        "beta1": jnp.zeros((C,), jnp.float32),
        "gamma2": jnp.ones((C,), jnp.float32),
        "beta2": jnp.zeros((C,), jnp.float32),
    }

    out = jax.block_until_ready(resnet_block_forward(x, params))
    ref = jax.block_until_ready(ref_forward(x, params))

    assert out.shape == (N, C, H, W), out.shape
    np.testing.assert_allclose(np.asarray(out), np.asarray(ref), atol=2e-4, rtol=2e-4)
    print("KERNEL_OK")
</pallas_src>

<mosaic_0001>
module attributes {stable_mosaic.version = 11 : i64} {
  func.func @kernel(%arg0: i32, %arg1: memref<1x18x72xf32, #tpu.memory_space<vmem>>, %arg2: memref<9x64x64xf32, #tpu.memory_space<vmem>>, %arg3: memref<64x4xf32, #tpu.memory_space<vmem>>, %arg4: memref<1x16x64xf32, #tpu.memory_space<vmem>>, %arg5: memref<1x2x4xf32, #tpu.memory_space<vmem>>) attributes {dimension_semantics = [#tpu.dimension_semantics<parallel>], iteration_bounds = array<i64: 2>, scalar_prefetch = 0 : i64, scratch_operands = 0 : i64, tpu.core_type = #tpu.core_type<tc>, window_params = [{transform_indices = @transform_0, window_bounds = array<i64: 1, 18, 72>}, {pipeline_mode = #tpu.pipeline_mode<synchronous>, transform_indices = @transform_1, window_bounds = array<i64: 9, 64, 64>}, {pipeline_mode = #tpu.pipeline_mode<synchronous>, transform_indices = @transform_2, window_bounds = array<i64: 64, 4>}, {transform_indices = @transform_3, window_bounds = array<i64: 1, 16, 64>}, {transform_indices = @transform_4, window_bounds = array<i64: 1, 2, 4>}]} {
    %c0 = arith.constant 0 : index
    %c0_0 = arith.constant 0 : index
    %c0_1 = arith.constant 0 : index
    %0 = vector.load %arg1[%c0, %c0_0, %c0_1] : memref<1x18x72xf32, #tpu.memory_space<vmem>>, vector<1x18x72xf32>
    %1 = vector.shape_cast %0 : vector<1x18x72xf32> to vector<18x72xf32>
    %cst = arith.constant 0.000000e+00 : f32
    %2 = vector.broadcast %cst : f32 to vector<16x64xf32>
    %3 = vector.extract_strided_slice %1 {offsets = [0, 0], sizes = [16, 64], strides = [1, 1]} : vector<18x72xf32> to vector<16x64xf32>
    %c0_2 = arith.constant 0 : index
    %c0_3 = arith.constant 0 : index
    %c0_4 = arith.constant 0 : index
    %4 = vector.load %arg2[%c0_2, %c0_3, %c0_4] : memref<9x64x64xf32, #tpu.memory_space<vmem>>, vector<1x64x64xf32>
    %5 = vector.shape_cast %4 : vector<1x64x64xf32> to vector<64x64xf32>
    %cst_5 = arith.constant dense<0.000000e+00> : vector<16x64xf32>
    %6 = tpu.matmul %3, %5, %cst_5 {dimension_numbers = #tpu.dot_dimension_numbers<[1], [0], [0], [1], [0, 0, 1, 1], [], []>} : vector<16x64xf32>, vector<64x64xf32>, vector<16x64xf32> -> vector<16x64xf32>
    %7 = arith.addf %2, %6 : vector<16x64xf32>
    %8 = vector.extract_strided_slice %1 {offsets = [0, 4], sizes = [16, 64], strides = [1, 1]} : vector<18x72xf32> to vector<16x64xf32>
    %c1 = arith.constant 1 : index
    %c0_6 = arith.constant 0 : index
    %c0_7 = arith.constant 0 : index
    %9 = vector.load %arg2[%c1, %c0_6, %c0_7] : memref<9x64x64xf32, #tpu.memory_space<vmem>>, vector<1x64x64xf32>
    %10 = vector.shape_cast %9 : vector<1x64x64xf32> to vector<64x64xf32>
    %cst_8 = arith.constant dense<0.000000e+00> : vector<16x64xf32>
    %11 = tpu.matmul %8, %10, %cst_8 {dimension_numbers = #tpu.dot_dimension_numbers<[1], [0], [0], [1], [0, 0, 1, 1], [], []>} : vector<16x64xf32>, vector<64x64xf32>, vector<16x64xf32> -> vector<16x64xf32>
    %12 = arith.addf %7, %11 : vector<16x64xf32>
    %13 = vector.extract_strided_slice %1 {offsets = [0, 8], sizes = [16, 64], strides = [1, 1]} : vector<18x72xf32> to vector<16x64xf32>
    %c2 = arith.constant 2 : index
    %c0_9 = arith.constant 0 : index
    %c0_10 = arith.constant 0 : index
    %14 = vector.load %arg2[%c2, %c0_9, %c0_10] : memref<9x64x64xf32, #tpu.memory_space<vmem>>, vector<1x64x64xf32>
    %15 = vector.shape_cast %14 : vector<1x64x64xf32> to vector<64x64xf32>
    %cst_11 = arith.constant dense<0.000000e+00> : vector<16x64xf32>
    %16 = tpu.matmul %13, %15, %cst_11 {dimension_numbers = #tpu.dot_dimension_numbers<[1], [0], [0], [1], [0, 0, 1, 1], [], []>} : vector<16x64xf32>, vector<64x64xf32>, vector<16x64xf32> -> vector<16x64xf32>
    %17 = arith.addf %12, %16 : vector<16x64xf32>
    %18 = vector.extract_strided_slice %1 {offsets = [1, 0], sizes = [16, 64], strides = [1, 1]} : vector<18x72xf32> to vector<16x64xf32>
    %c3 = arith.constant 3 : index
    %c0_12 = arith.constant 0 : index
    %c0_13 = arith.constant 0 : index
    %19 = vector.load %arg2[%c3, %c0_12, %c0_13] : memref<9x64x64xf32, #tpu.memory_space<vmem>>, vector<1x64x64xf32>
    %20 = vector.shape_cast %19 : vector<1x64x64xf32> to vector<64x64xf32>
    %cst_14 = arith.constant dense<0.000000e+00> : vector<16x64xf32>
    %21 = tpu.matmul %18, %20, %cst_14 {dimension_numbers = #tpu.dot_dimension_numbers<[1], [0], [0], [1], [0, 0, 1, 1], [], []>} : vector<16x64xf32>, vector<64x64xf32>, vector<16x64xf32> -> vector<16x64xf32>
    %22 = arith.addf %17, %21 : vector<16x64xf32>
    %23 = vector.extract_strided_slice %1 {offsets = [1, 4], sizes = [16, 64], strides = [1, 1]} : vector<18x72xf32> to vector<16x64xf32>
    %c4 = arith.constant 4 : index
    %c0_15 = arith.constant 0 : index
    %c0_16 = arith.constant 0 : index
    %24 = vector.load %arg2[%c4, %c0_15, %c0_16] : memref<9x64x64xf32, #tpu.memory_space<vmem>>, vector<1x64x64xf32>
    %25 = vector.shape_cast %24 : vector<1x64x64xf32> to vector<64x64xf32>
    %cst_17 = arith.constant dense<0.000000e+00> : vector<16x64xf32>
    %26 = tpu.matmul %23, %25, %cst_17 {dimension_numbers = #tpu.dot_dimension_numbers<[1], [0], [0], [1], [0, 0, 1, 1], [], []>} : vector<16x64xf32>, vector<64x64xf32>, vector<16x64xf32> -> vector<16x64xf32>
    %27 = arith.addf %22, %26 : vector<16x64xf32>
    %28 = vector.extract_strided_slice %1 {offsets = [1, 8], sizes = [16, 64], strides = [1, 1]} : vector<18x72xf32> to vector<16x64xf32>
    %c5 = arith.constant 5 : index
    %c0_18 = arith.constant 0 : index
    %c0_19 = arith.constant 0 : index
    %29 = vector.load %arg2[%c5, %c0_18, %c0_19] : memref<9x64x64xf32, #tpu.memory_space<vmem>>, vector<1x64x64xf32>
    %30 = vector.shape_cast %29 : vector<1x64x64xf32> to vector<64x64xf32>
    %cst_20 = arith.constant dense<0.000000e+00> : vector<16x64xf32>
    %31 = tpu.matmul %28, %30, %cst_20 {dimension_numbers = #tpu.dot_dimension_numbers<[1], [0], [0], [1], [0, 0, 1, 1], [], []>} : vector<16x64xf32>, vector<64x64xf32>, vector<16x64xf32> -> vector<16x64xf32>
    %32 = arith.addf %27, %31 : vector<16x64xf32>
    %33 = vector.extract_strided_slice %1 {offsets = [2, 0], sizes = [16, 64], strides = [1, 1]} : vector<18x72xf32> to vector<16x64xf32>
    %c6 = arith.constant 6 : index
    %c0_21 = arith.constant 0 : index
    %c0_22 = arith.constant 0 : index
    %34 = vector.load %arg2[%c6, %c0_21, %c0_22] : memref<9x64x64xf32, #tpu.memory_space<vmem>>, vector<1x64x64xf32>
    %35 = vector.shape_cast %34 : vector<1x64x64xf32> to vector<64x64xf32>
    %cst_23 = arith.constant dense<0.000000e+00> : vector<16x64xf32>
    %36 = tpu.matmul %33, %35, %cst_23 {dimension_numbers = #tpu.dot_dimension_numbers<[1], [0], [0], [1], [0, 0, 1, 1], [], []>} : vector<16x64xf32>, vector<64x64xf32>, vector<16x64xf32> -> vector<16x64xf32>
    %37 = arith.addf %32, %36 : vector<16x64xf32>
    %38 = vector.extract_strided_slice %1 {offsets = [2, 4], sizes = [16, 64], strides = [1, 1]} : vector<18x72xf32> to vector<16x64xf32>
    %c7 = arith.constant 7 : index
    %c0_24 = arith.constant 0 : index
    %c0_25 = arith.constant 0 : index
    %39 = vector.load %arg2[%c7, %c0_24, %c0_25] : memref<9x64x64xf32, #tpu.memory_space<vmem>>, vector<1x64x64xf32>
    %40 = vector.shape_cast %39 : vector<1x64x64xf32> to vector<64x64xf32>
    %cst_26 = arith.constant dense<0.000000e+00> : vector<16x64xf32>
    %41 = tpu.matmul %38, %40, %cst_26 {dimension_numbers = #tpu.dot_dimension_numbers<[1], [0], [0], [1], [0, 0, 1, 1], [], []>} : vector<16x64xf32>, vector<64x64xf32>, vector<16x64xf32> -> vector<16x64xf32>
    %42 = arith.addf %37, %41 : vector<16x64xf32>
    %43 = vector.extract_strided_slice %1 {offsets = [2, 8], sizes = [16, 64], strides = [1, 1]} : vector<18x72xf32> to vector<16x64xf32>
    %c8 = arith.constant 8 : index
    %c0_27 = arith.constant 0 : index
    %c0_28 = arith.constant 0 : index
    %44 = vector.load %arg2[%c8, %c0_27, %c0_28] : memref<9x64x64xf32, #tpu.memory_space<vmem>>, vector<1x64x64xf32>
    %45 = vector.shape_cast %44 : vector<1x64x64xf32> to vector<64x64xf32>
    %cst_29 = arith.constant dense<0.000000e+00> : vector<16x64xf32>
    %46 = tpu.matmul %43, %45, %cst_29 {dimension_numbers = #tpu.dot_dimension_numbers<[1], [0], [0], [1], [0, 0, 1, 1], [], []>} : vector<16x64xf32>, vector<64x64xf32>, vector<16x64xf32> -> vector<16x64xf32>
    %47 = arith.addf %42, %46 : vector<16x64xf32>
    %c0_30 = arith.constant 0 : index
    %c0_31 = arith.constant 0 : index
    %c0_32 = arith.constant 0 : index
    %48 = vector.load %arg4[%c0_30, %c0_31, %c0_32] : memref<1x16x64xf32, #tpu.memory_space<vmem>>, vector<1x16x64xf32>
    %49 = vector.shape_cast %48 : vector<1x16x64xf32> to vector<16x64xf32>
    %50 = vector.shape_cast %47 : vector<16x64xf32> to vector<1x16x64xf32>
    tpu.vector_store %arg4[%c0_30, %c0_31, %c0_32], %50 {strides = array<i32>} : memref<1x16x64xf32, #tpu.memory_space<vmem>>, vector<1x16x64xf32>,
    %cst_33 = arith.constant dense<0.000000e+00> : vector<64xf32>
    %51 = vector.multi_reduction <add>, %47, %cst_33 [0] : vector<16x64xf32> to vector<64xf32>
    %52 = vector.shape_cast %51 : vector<64xf32> to vector<1x64xf32>
    %53 = arith.mulf %47, %47 : vector<16x64xf32>
    %cst_34 = arith.constant dense<0.000000e+00> : vector<64xf32>
    %54 = vector.multi_reduction <add>, %53, %cst_34 [0] : vector<16x64xf32> to vector<64xf32>
    %55 = vector.shape_cast %54 : vector<64xf32> to vector<1x64xf32>
    %c0_35 = arith.constant 0 : index
    %c0_36 = arith.constant 0 : index
    %56 = vector.load %arg3[%c0_35, %c0_36] : memref<64x4xf32, #tpu.memory_space<vmem>>, vector<64x4xf32>
    %cst_37 = arith.constant dense<0.000000e+00> : vector<1x4xf32>
    %57 = tpu.matmul %52, %56, %cst_37 {dimension_numbers = #tpu.dot_dimension_numbers<[1], [0], [0], [1], [0, 0, 1, 1], [], []>} : vector<1x64xf32>, vector<64x4xf32>, vector<1x4xf32> -> vector<1x4xf32>
    %c0_38 = arith.constant 0 : index
    %c0_39 = arith.constant 0 : index
    %58 = vector.load %arg3[%c0_38, %c0_39] : memref<64x4xf32, #tpu.memory_space<vmem>>, vector<64x4xf32>
    %cst_40 = arith.constant dense<0.000000e+00> : vector<1x4xf32>
    %59 = tpu.matmul %55, %58, %cst_40 {dimension_numbers = #tpu.dot_dimension_numbers<[1], [0], [0], [1], [0, 0, 1, 1], [], []>} : vector<1x64xf32>, vector<64x4xf32>, vector<1x4xf32> -> vector<1x4xf32>
    %60 = tpu.concatenate %57, %59 in 0 : vector<1x4xf32>, vector<1x4xf32> -> vector<2x4xf32>
    %c0_41 = arith.constant 0 : index
    %c0_42 = arith.constant 0 : index
    %c0_43 = arith.constant 0 : index
    %61 = vector.load %arg5[%c0_41, %c0_42, %c0_43] : memref<1x2x4xf32, #tpu.memory_space<vmem>>, vector<1x2x4xf32>
    %62 = vector.shape_cast %61 : vector<1x2x4xf32> to vector<2x4xf32>
    %63 = vector.shape_cast %60 : vector<2x4xf32> to vector<1x2x4xf32>
    tpu.vector_store %arg5[%c0_41, %c0_42, %c0_43], %63 {strides = array<i32>} : memref<1x2x4xf32, #tpu.memory_space<vmem>>, vector<1x2x4xf32>,
    return
  }
  func.func @transform_0(%arg0: i32) -> (i32, i32, i32) {
    %c0_i32 = arith.constant 0 : i32
    %c0_i32_0 = arith.constant 0 : i32
    %c0_i32_1 = arith.constant 0 : i32
    return %arg0, %c0_i32, %c0_i32_0 : i32, i32, i32
  }
  func.func @transform_1(%arg0: i32) -> (i32, i32, i32) {
    %c0_i32 = arith.constant 0 : i32
    %c0_i32_0 = arith.constant 0 : i32
    %c0_i32_1 = arith.constant 0 : i32
    %c0_i32_2 = arith.constant 0 : i32
    return %c0_i32, %c0_i32_0, %c0_i32_1 : i32, i32, i32
  }
  func.func @transform_2(%arg0: i32) -> (i32, i32) {
    %c0_i32 = arith.constant 0 : i32
    %c0_i32_0 = arith.constant 0 : i32
    %c0_i32_1 = arith.constant 0 : i32
    return %c0_i32, %c0_i32_0 : i32, i32
  }
  func.func @transform_3(%arg0: i32) -> (i32, i32, i32) {
    %c0_i32 = arith.constant 0 : i32
    %c0_i32_0 = arith.constant 0 : i32
    %c0_i32_1 = arith.constant 0 : i32
    return %arg0, %c0_i32, %c0_i32_0 : i32, i32, i32
  }
  func.func @transform_4(%arg0: i32) -> (i32, i32, i32) {
    %c0_i32 = arith.constant 0 : i32
    %c0_i32_0 = arith.constant 0 : i32
    %c0_i32_1 = arith.constant 0 : i32
    return %arg0, %c0_i32, %c0_i32_0 : i32, i32, i32
  }
}

</mosaic_0001>

<llo_original>
// kernel: tpu_custom_call.1
$region0: #{tpu_custom_call.1}
  #allocation0 [shape = 'u32[]', space=smem, size = 0x4, offset = 0x4, fixed_abs, tag = 'smem constant byte address 0x4 - core index']
  #allocation1 [shape = 'u32[72,128]{1,0:T(1,128)}', space=vmem, size = 0x9000, scoped, tag = 'internal scratch']
  %s0 = inlined_call_operand.vmem [shape: f32[2,18,72], index: 0, kind: input, shape index: {}]
  %s1 = inlined_call_operand.hbm [shape: f32[9,64,64], index: 1, kind: input, shape index: {}]
  %s2 = inlined_call_operand.vmem [shape: f32[64,4], index: 2, kind: input, shape index: {}]
  %s3 = inlined_call_operand.hbm [shape: f32[2,16,64], index: 3, kind: output, shape index: {0}]
  %s4 = inlined_call_operand.hbm [shape: f32[2,2,4], index: 4, kind: output, shape index: {1}]
  %5 = xla_tuple %s3, %s4
  %s6 = sld [smem:[#allocation0]]
  $region57: #{tpu_custom_call.1} parent=0
    _
  %s8 = ssub.s32 1, %s6
  %s9 = scalar_select 0, %s8, %s6
  $region1: #{tpu_custom_call.1} parent=0
    #allocation2 [shape = 'u8[294912]{0}', space=vmem, size = 0x48000, scoped, tag = 'input window, operand 1, single buffered']
    #allocation3 [shape = 's32[2]{0}', space=sflag, size = 0x8, scoped, tag = 'scoped memory for tpu_custom_call.1']
    #allocation4 [shape = 's32[2]{0}', space=sflag, size = 0x8, scoped, tag = 'scoped memory for tpu_custom_call.1']
    #allocation5 [shape = 'u8[16384]{0}', space=vmem, size = 0x4000, scoped, tag = 'output window, operand 0']
    #allocation6 [shape = 'u8[2048]{0}', space=vmem, size = 0x800, scoped, tag = 'output window, operand 1']
    #allocation7 [shape = 's32[2]{0}', space=sflag, size = 0x8, scoped, tag = 'scoped memory for tpu_custom_call.1']
    %10 = vsyncpa [#allocation3], 0
    %11 = vsyncpa [#allocation4], 0
    %s12 = scalar_lea.sflag [#allocation4], 1
    %13 = vsyncpa %s12, 0
    %14 = vsyncpa [#allocation7], 0
    %s15 = scalar_lea.sflag [#allocation7], 1
    %16 = vsyncpa %s15, 0
    loop: start=0, step=1, limit=4
    $region2: #{tpu_custom_call.1} parent=1 // loop_pre_header
      _
    $region3: #{tpu_custom_call.1} parent=1 // loop_header
      %s18 = sphi 0, %s22
      %p19 = scmp.ge.s32.totalorder %s18, 4
      %s28 = sphi 0, %s30
      %s31 = sphi 0, %s28
      %s32 = sphi 0, %s31
      %s48 = sphi 0, %s32
      %s52 = sphi 0, %s52
      %s54 = sphi 0, %s52
      %s55 = sphi 0, %s54
      %s69 = sphi 0, %s55
      %s73 = sphi 0, %s73
      %s75 = sphi 0, %s73
      %s76 = sphi 0, %s75
      %s90 = sphi 0, %s76
      %s96 = sphi 0, %s98
      %s99 = sphi 0, %s96
      %s100 = sphi 0, %s99
      %s116 = sphi 0, %s100
      %s122 = sphi 0, %s124
      %s125 = sphi 0, %s122
      %s126 = sphi 0, %s125
      %s142 = sphi 0, %s126
    $region4: #{tpu_custom_call.1} parent=1 // loop_header_branch
      %21 = sbr.rel (%p19) target = $region8
    $region5: #{tpu_custom_call.1} parent=1 // loop_body
      %s23 = ssub.s32 %s18, 1
      %s24 = ssub.s32 %s18, 2
      %s25 = sadd.s32 %s18, 1
      %s26 = ssub.s32 %s18, %s25
      %p27 = scmp.eq.s32.totalorder %s26, 0
      %s29 = sadd.s32 %s28, 1
      %s30 = scalar_select %p27, %s28, %s29
      %p33 = pneg %p27
      %p34 = scmp.eq.s32.totalorder %s18, 1
      %p35 = por %p33, %p34
      %p36 = scmp.ne.s32.totalorder %s28, %s31
      %p37 = scmp.eq.s32.totalorder %s18, 0
      %p38 = por %p36, %p37
      %p39 = scmp.ne.s32.totalorder %s28, %s31
      %p40 = scmp.eq.s32.totalorder %s23, 1
      %p41 = por %p39, %p40
      %p42 = scmp.ne.s32.totalorder %s31, %s32
      %p43 = scmp.eq.s32.totalorder %s23, 0
      %p44 = por %p42, %p43
      %p45 = scmp.ne.s32.totalorder %s31, %s32
      %p46 = scmp.eq.s32.totalorder %s24, 1
      %p47 = por %p45, %p46
      %p49 = scmp.ne.s32.totalorder %s32, %s48
      %p50 = scmp.eq.s32.totalorder %s24, 0
      %p51 = por %p49, %p50
      %s53 = sadd.s32 %s52, 1
      %p56 = scmp.eq.s32.totalorder %s18, 1
      %p57 = scmp.ne.s32.totalorder %s52, %s54
      %p58 = scmp.eq.s32.totalorder %s18, 0
      %p59 = por %p57, %p58
      %p60 = scmp.ne.s32.totalorder %s52, %s54
      %p61 = scmp.eq.s32.totalorder %s23, 1
      %p62 = por %p60, %p61
      %p63 = scmp.ne.s32.totalorder %s54, %s55
      %p64 = scmp.eq.s32.totalorder %s23, 0
      %p65 = por %p63, %p64
      %p66 = scmp.ne.s32.totalorder %s54, %s55
      %p67 = scmp.eq.s32.totalorder %s24, 1
      %p68 = por %p66, %p67
      %p70 = scmp.ne.s32.totalorder %s55, %s69
      %p71 = scmp.eq.s32.totalorder %s24, 0
      %p72 = por %p70, %p71
      %s74 = sadd.s32 %s73, 1
      %p77 = scmp.eq.s32.totalorder %s18, 1
      %p78 = scmp.ne.s32.totalorder %s73, %s75
      %p79 = scmp.eq.s32.totalorder %s18, 0
      %p80 = por %p78, %p79
      %p81 = scmp.ne.s32.totalorder %s73, %s75
      %p82 = scmp.eq.s32.totalorder %s23, 1
      %p83 = por %p81, %p82
      %p84 = scmp.ne.s32.totalorder %s75, %s76
      %p85 = scmp.eq.s32.totalorder %s23, 0
      %p86 = por %p84, %p85
      %p87 = scmp.ne.s32.totalorder %s75, %s76
      %p88 = scmp.eq.s32.totalorder %s24, 1
      %p89 = por %p87, %p88
      %p91 = scmp.ne.s32.totalorder %s76, %s90
      %p92 = scmp.eq.s32.totalorder %s24, 0
      %p93 = por %p91, %p92
      %s94 = ssub.s32 %s18, %s25
      %p95 = scmp.eq.s32.totalorder %s94, 0
      %s97 = sadd.s32 %s96, 1
      %s98 = scalar_select %p95, %s96, %s97
      %p101 = pneg %p95
      %p102 = scmp.eq.s32.totalorder %s18, 1
      %p103 = por %p101, %p102
      %p104 = scmp.ne.s32.totalorder %s96, %s99
      %p105 = scmp.eq.s32.totalorder %s18, 0
      %p106 = por %p104, %p105
      %p107 = scmp.ne.s32.totalorder %s96, %s99
      %p108 = scmp.eq.s32.totalorder %s23, 1
      %p109 = por %p107, %p108
      %p110 = scmp.ne.s32.totalorder %s99, %s100
      %p111 = scmp.eq.s32.totalorder %s23, 0
      %p112 = por %p110, %p111
      %p113 = scmp.ne.s32.totalorder %s99, %s100
      %p114 = scmp.eq.s32.totalorder %s24, 1
      %p115 = por %p113, %p114
      %p117 = scmp.ne.s32.totalorder %s100, %s116
      %p118 = scmp.eq.s32.totalorder %s24, 0
      %p119 = por %p117, %p118
      %s120 = ssub.s32 %s18, %s25
      %p121 = scmp.eq.s32.totalorder %s120, 0
      %s123 = sadd.s32 %s122, 1
      %s124 = scalar_select %p121, %s122, %s123
      %p127 = pneg %p121
      %p128 = scmp.eq.s32.totalorder %s18, 1
      %p129 = por %p127, %p128
      %p130 = scmp.ne.s32.totalorder %s122, %s125
      %p131 = scmp.eq.s32.totalorder %s18, 0
      %p132 = por %p130, %p131
      %p133 = scmp.ne.s32.totalorder %s122, %s125
      %p134 = scmp.eq.s32.totalorder %s23, 1
      %p135 = por %p133, %p134
      %p136 = scmp.ne.s32.totalorder %s125, %s126
      %p137 = scmp.eq.s32.totalorder %s23, 0
      %p138 = por %p136, %p137
      %p139 = scmp.ne.s32.totalorder %s125, %s126
      %p140 = scmp.eq.s32.totalorder %s24, 1
      %p141 = por %p139, %p140
      %p143 = scmp.ne.s32.totalorder %s126, %s142
      %p144 = scmp.eq.s32.totalorder %s24, 0
      %p145 = por %p143, %p144
      %p146 = scmp.le.s32.totalorder 1, %s18
      %p147 = scmp.lt.s32.totalorder %s18, 3
      %p148 = pnand %p146, %p147
      %p149 = pneg %p148
      // Predicated region
      $region9: #{tpu_custom_call.1} parent=5 // pred_check
        _
      $region10: #{tpu_custom_call.1} parent=5 // pred_check_branch
        %151 = sbr.rel (%p148) target = $region12
      $region11: #{tpu_custom_call.1} parent=5 // pred_region
        %s152 = ssub.s32 %s18, 1
        // Predicated region
        $region13: #{tpu_custom_call.1} parent=11 // pred_check
          %p153 = pneg %p65
        $region14: #{tpu_custom_call.1} parent=11 // pred_check_branch
          %155 = sbr.rel (%p153) target = $region16
        $region15: #{tpu_custom_call.1} parent=11 // pred_region
          %157 = vsyncadd [#allocation3], 0
          %s158 = sshll.u32 %s1, 4
          %s159 = int_to_ptr.hbm [resolvable:$true] %s158
          %s160 = sshll.u32 [#allocation2], 4
          %s161 = int_to_ptr.vmem [resolvable:$true] %s160
          %166 = dma.hbm_to_vmem [thread:$0]  %s159, 9216, %s161, [#allocation3], 128, 128, 8
        $region16: #{tpu_custom_call.1} parent=11 // pred_fallthru
          _
        // Predicated region
        $region17: #{tpu_custom_call.1} parent=11 // pred_check
          %p167 = pneg %p86
        $region18: #{tpu_custom_call.1} parent=11 // pred_check_branch
          %169 = sbr.rel (%p167) target = $region20
        $region19: #{tpu_custom_call.1} parent=11 // pred_region
          _
        $region20: #{tpu_custom_call.1} parent=11 // pred_fallthru
          _
      $region12: #{tpu_custom_call.1} parent=5 // pred_fallthru
        _
      %p170 = scmp.lt.s32.totalorder %s18, 2
      // Predicated region
      $region21: #{tpu_custom_call.1} parent=5 // pred_check
        %p171 = pneg %p170
      $region22: #{tpu_custom_call.1} parent=5 // pred_check_branch
        %173 = sbr.rel (%p171) target = $region24
      $region23: #{tpu_custom_call.1} parent=5 // pred_region
        // Predicated region
        $region25: #{tpu_custom_call.1} parent=23 // pred_check
          %p174 = pneg %p38
        $region26: #{tpu_custom_call.1} parent=23 // pred_check_branch
          %176 = sbr.rel (%p174) target = $region28
        $region27: #{tpu_custom_call.1} parent=23 // pred_region
          %p177 = scmp.lt.s32.totalorder %s18, 1
          %s178 = scalar_select %p177, %s18, 1
          %s179 = smul.addr %s178, 3
          %s180 = smul.addr %s179, 8
          %s181 = scalar_lea.vmem %s0, %s180
        $region28: #{tpu_custom_call.1} parent=23 // pred_fallthru
          _
      $region24: #{tpu_custom_call.1} parent=5 // pred_fallthru
        _
      %p182 = scmp.le.s32.totalorder 1, %s18
      %p183 = scmp.lt.s32.totalorder %s18, 3
      %p184 = pnand %p182, %p183
      %p185 = pneg %p184
      // Predicated region
      $region29: #{tpu_custom_call.1} parent=5 // pred_check
        _
      $region30: #{tpu_custom_call.1} parent=5 // pred_check_branch
        %187 = sbr.rel (%p184) target = $region32
      $region31: #{tpu_custom_call.1} parent=5 // pred_region
        %s188 = ssub.s32 %s18, 1
        // Predicated region
        $region33: #{tpu_custom_call.1} parent=31 // pred_check
          %p189 = pneg %p65
        $region34: #{tpu_custom_call.1} parent=31 // pred_check_branch
          %191 = sbr.rel (%p189) target = $region36
        $region35: #{tpu_custom_call.1} parent=31 // pred_region
          %193 = dma.done [#allocation3], 9216
        $region36: #{tpu_custom_call.1} parent=31 // pred_fallthru
          _
        %p194 = scmp.lt.s32.totalorder %s23, 1
        %s195 = scalar_select %p194, %s23, 1
        %s196 = smul.addr %s195, 3
        %s197 = smul.addr %s196, 8
        %s198 = scalar_lea.vmem %s0, %s197
        %p199 = pneg %p44
        %p200 = pneg %p41
        %p201 = pneg %p65
        %p202 = pneg %p62
        %p203 = pneg %p86
        %p204 = pneg %p83
        %p205 = pneg %p112
        %p206 = pneg %p109
        %s207 = sand.u32 %s99, 1
        %s208 = scalar_lea.sflag [#allocation4], %s207
        %s209 = sand.u32 %s99, 1
        %s210 = smul.addr %s209, 16
        %s211 = scalar_lea.vmem [#allocation5], %s210
        %p212 = pneg %p138
        %p213 = pneg %p135
        %s214 = sand.u32 %s125, 1
        %s215 = scalar_lea.sflag [#allocation7], %s214
        %s216 = sand.u32 %s125, 1
        %s217 = smul.addr %s216, 2
        %s218 = scalar_lea.vmem [#allocation6], %s217
        %p219 = scmp.lt.s32.totalorder %s23, 1
        %s220 = scalar_select %p219, %s23, 1
        %s221 = smul.addr %s220, 3
        %s222 = smul.addr %s221, 8
        %s223 = scalar_lea.vmem %s0, %s222
        %v224 = vld [vmem:[%s223] sm:$0xff]
        %v225 = vld [vmem:[%s223 + $0x8] sm:$0xff]
        %v226 = vld [vmem:[%s223 + $0x10] sm:$0x3]
        %v227 = vld [vmem:[#allocation2] sm:$0xff]
        %v228 = vld [vmem:[#allocation2 + $0x8] sm:$0xff]
        %v229 = vld [vmem:[#allocation2 + $0x10] sm:$0xff]
        %v230 = vld [vmem:[#allocation2 + $0x18] sm:$0xff]
        %v231 = vld [vmem:[#allocation2 + $0x20] sm:$0xff]
        %v232 = vld [vmem:[#allocation2 + $0x28] sm:$0xff]
        %v233 = vld [vmem:[#allocation2 + $0x30] sm:$0xff]
        %v234 = vld [vmem:[#allocation2 + $0x38] sm:$0xff]
        %s235 = scalar_lea.vmem [#allocation2], 64
        %v236 = vld [vmem:[%s235] sm:$0xff]
        %v237 = vld [vmem:[%s235 + $0x8] sm:$0xff]
        %v238 = vld [vmem:[%s235 + $0x10] sm:$0xff]
        %v239 = vld [vmem:[%s235 + $0x18] sm:$0xff]
        %v240 = vld [vmem:[%s235 + $0x20] sm:$0xff]
        %v241 = vld [vmem:[%s235 + $0x28] sm:$0xff]
        %v242 = vld [vmem:[%s235 + $0x30] sm:$0xff]
        %v243 = vld [vmem:[%s235 + $0x38] sm:$0xff]
        %246 = vrot.lane.b32.xlu0 %v224, 124
        %v247 = vpop.permute.xlu0 %246
        %248 = vrot.lane.b32.xlu0 %v225, 124
        %v249 = vpop.permute.xlu0 %248
        %vm250 = vcmask 523264
        %v251 = vsel %vm250, %v247, 0
        %v253 = vsel %vm250, %v249, 0
        %255 = vmatpush.msra.mxu0 0.0
        %256 = vmatpush.msra.mxu0 0.0
        %257 = vmatpush.msra.mxu0 0.0
        %258 = vmatpush.msra.mxu0 0.0
        %259 = vmatpush.msra.mxu0 0.0
        %260 = vmatpush.msra.mxu0 0.0
        %261 = vmatpush.msra.mxu0 0.0
        %262 = vmatpush.msra.mxu0 0.0
        %263 = vmatpush.msra.mxu0 %v243
        %264 = vmatpush.msra.mxu0 %v242
        %265 = vmatpush.msra.mxu0 %v241
        %266 = vmatpush.msra.mxu0 %v240
        %267 = vmatpush.msra.mxu0 %v239
        %268 = vmatpush.msra.mxu0 %v238
        %269 = vmatpush.msra.mxu0 %v237
        %270 = vmatpush.msra.mxu0 %v236
        %271 = vmatmul.f32.gmra.mxu0 %v251
        %v272 = vpop.f32.mrf.mxu0
        %v273 = vadd.f32 0.0, %v272
        %274 = vmatmul.f32.gmra.mxu0 %v253
        %v275 = vpop.f32.mrf.mxu0
        %v276 = vadd.f32 0.0, %v275
        %277 = vdwg.mxu0
        %v278 = vsel %vm250, %v224, 0
        %v280 = vsel %vm250, %v225, 0
        %282 = vmatpush.msra.mxu0 0.0
        %283 = vmatpush.msra.mxu0 0.0
        %284 = vmatpush.msra.mxu0 0.0
        %285 = vmatpush.msra.mxu0 0.0
        %286 = vmatpush.msra.mxu0 0.0
        %287 = vmatpush.msra.mxu0 0.0
        %288 = vmatpush.msra.mxu0 0.0
        %289 = vmatpush.msra.mxu0 0.0
        %290 = vmatpush.msra.mxu0 %v234
        %291 = vmatpush.msra.mxu0 %v233
        %292 = vmatpush.msra.mxu0 %v232
        %293 = vmatpush.msra.mxu0 %v231
        %294 = vmatpush.msra.mxu0 %v230
        %295 = vmatpush.msra.mxu0 %v229
        %296 = vmatpush.msra.mxu0 %v228
        %297 = vmatpush.msra.mxu0 %v227
        %298 = vmatmul.f32.gmra.mxu0 %v278
        %v299 = vpop.f32.mrf.mxu0
        %v300 = vadd.f32 %v273, %v299
        %301 = vmatmul.f32.gmra.mxu0 %v280
        %v302 = vpop.f32.mrf.mxu0
        %v303 = vadd.f32 %v276, %v302
        %304 = vdwg.mxu0
        %s305 = scalar_lea.vmem [#allocation2], 128
        %v306 = vld [vmem:[%s305] sm:$0xff]
        %v307 = vld [vmem:[%s305 + $0x8] sm:$0xff]
        %v308 = vld [vmem:[%s305 + $0x10] sm:$0xff]
        %v309 = vld [vmem:[%s305 + $0x18] sm:$0xff]
        %v310 = vld [vmem:[%s305 + $0x20] sm:$0xff]
        %v311 = vld [vmem:[%s305 + $0x28] sm:$0xff]
        %v312 = vld [vmem:[%s305 + $0x30] sm:$0xff]
        %v313 = vld [vmem:[%s305 + $0x38] sm:$0xff]
        %314 = vrot.lane.b32.xlu0 %v224, 120
        %v315 = vpop.permute.xlu0 %314
        %316 = vrot.lane.b32.xlu0 %v225, 120
        %v317 = vpop.permute.xlu0 %316
        %v318 = vsel %vm250, %v315, 0
        %v320 = vsel %vm250, %v317, 0
        %322 = vmatpush.msra.mxu0 0.0
        %323 = vmatpush.msra.mxu0 0.0
        %324 = vmatpush.msra.mxu0 0.0
        %325 = vmatpush.msra.mxu0 0.0
        %326 = vmatpush.msra.mxu0 0.0
        %327 = vmatpush.msra.mxu0 0.0
        %328 = vmatpush.msra.mxu0 0.0
        %329 = vmatpush.msra.mxu0 0.0
        %330 = vmatpush.msra.mxu0 %v313
        %331 = vmatpush.msra.mxu0 %v312
        %332 = vmatpush.msra.mxu0 %v311
        %333 = vmatpush.msra.mxu0 %v310
        %334 = vmatpush.msra.mxu0 %v309
        %335 = vmatpush.msra.mxu0 %v308
        %336 = vmatpush.msra.mxu0 %v307
        %337 = vmatpush.msra.mxu0 %v306
        %338 = vmatmul.f32.gmra.mxu0 %v318
        %v339 = vpop.f32.mrf.mxu0
        %v340 = vadd.f32 0.0, %v339
        %341 = vmatmul.f32.gmra.mxu0 %v320
        %v342 = vpop.f32.mrf.mxu0
        %v343 = vadd.f32 0.0, %v342
        %344 = vdwg.mxu0
        %v345 = vadd.f32 %v300, %v340
        %v346 = vadd.f32 %v303, %v343
        %s347 = scalar_lea.vmem [#allocation2], 192
        %v348 = vld [vmem:[%s347] sm:$0xff]
        %v349 = vld [vmem:[%s347 + $0x8] sm:$0xff]
        %v350 = vld [vmem:[%s347 + $0x10] sm:$0xff]
        %v351 = vld [vmem:[%s347 + $0x18] sm:$0xff]
        %v352 = vld [vmem:[%s347 + $0x20] sm:$0xff]
        %v353 = vld [vmem:[%s347 + $0x28] sm:$0xff]
        %v354 = vld [vmem:[%s347 + $0x30] sm:$0xff]
        %v355 = vld [vmem:[%s347 + $0x38] sm:$0xff]
        %vm357 = vcmask 1046528
        %v358 = vrot.slane %v224, 1
        %v359 = vrot.slane %v225, 1
        %v360 = vsel %vm357, %v358, %v359
        %v361 = vrot.slane %v226, 1
        %v362 = vsel %vm357, %v359, %v361
        %v363 = vsel %vm250, %v360, 0
        %v365 = vsel %vm250, %v362, 0
        %367 = vmatpush.msra.mxu0 0.0
        %368 = vmatpush.msra.mxu0 0.0
        %369 = vmatpush.msra.mxu0 0.0
        %370 = vmatpush.msra.mxu0 0.0
        %371 = vmatpush.msra.mxu0 0.0
        %372 = vmatpush.msra.mxu0 0.0
        %373 = vmatpush.msra.mxu0 0.0
        %374 = vmatpush.msra.mxu0 0.0
        %375 = vmatpush.msra.mxu0 %v355
        %376 = vmatpush.msra.mxu0 %v354
        %377 = vmatpush.msra.mxu0 %v353
        %378 = vmatpush.msra.mxu0 %v352
        %379 = vmatpush.msra.mxu0 %v351
        %380 = vmatpush.msra.mxu0 %v350
        %381 = vmatpush.msra.mxu0 %v349
        %382 = vmatpush.msra.mxu0 %v348
        %383 = vmatmul.f32.gmra.mxu0 %v363
        %v384 = vpop.f32.mrf.mxu0
        %v385 = vadd.f32 0.0, %v384
        %386 = vmatmul.f32.gmra.mxu0 %v365
        %v387 = vpop.f32.mrf.mxu0
        %v388 = vadd.f32 0.0, %v387
        %389 = vdwg.mxu0
        %v390 = vadd.f32 %v345, %v385
        %v391 = vadd.f32 %v346, %v388
        %s392 = scalar_lea.vmem [#allocation2], 256
        %v393 = vld [vmem:[%s392] sm:$0xff]
        %v394 = vld [vmem:[%s392 + $0x8] sm:$0xff]
        %v395 = vld [vmem:[%s392 + $0x10] sm:$0xff]
        %v396 = vld [vmem:[%s392 + $0x18] sm:$0xff]
        %v397 = vld [vmem:[%s392 + $0x20] sm:$0xff]
        %v398 = vld [vmem:[%s392 + $0x28] sm:$0xff]
        %v399 = vld [vmem:[%s392 + $0x30] sm:$0xff]
        %v400 = vld [vmem:[%s392 + $0x38] sm:$0xff]
        %401 = vrot.lane.b32.xlu0 %v360, 124
        %v402 = vpop.permute.xlu0 %401
        %403 = vrot.lane.b32.xlu0 %v362, 124
        %v404 = vpop.permute.xlu0 %403
        %v405 = vsel %vm250, %v402, 0
        %v407 = vsel %vm250, %v404, 0
        %409 = vmatpush.msra.mxu0 0.0
        %410 = vmatpush.msra.mxu0 0.0
        %411 = vmatpush.msra.mxu0 0.0
        %412 = vmatpush.msra.mxu0 0.0
        %413 = vmatpush.msra.mxu0 0.0
        %414 = vmatpush.msra.mxu0 0.0
        %415 = vmatpush.msra.mxu0 0.0
        %416 = vmatpush.msra.mxu0 0.0
        %417 = vmatpush.msra.mxu0 %v400
        %418 = vmatpush.msra.mxu0 %v399
        %419 = vmatpush.msra.mxu0 %v398
        %420 = vmatpush.msra.mxu0 %v397
        %421 = vmatpush.msra.mxu0 %v396
        %422 = vmatpush.msra.mxu0 %v395
        %423 = vmatpush.msra.mxu0 %v394
        %424 = vmatpush.msra.mxu0 %v393
        %425 = vmatmul.f32.gmra.mxu0 %v405
        %v426 = vpop.f32.mrf.mxu0
        %v427 = vadd.f32 0.0, %v426
        %428 = vmatmul.f32.gmra.mxu0 %v407
        %v429 = vpop.f32.mrf.mxu0
        %v430 = vadd.f32 0.0, %v429
        %431 = vdwg.mxu0
        %v432 = vadd.f32 %v390, %v427
        %v433 = vadd.f32 %v391, %v430
        %s434 = scalar_lea.vmem [#allocation2], 320
        %v435 = vld [vmem:[%s434] sm:$0xff]
        %v436 = vld [vmem:[%s434 + $0x8] sm:$0xff]
        %v437 = vld [vmem:[%s434 + $0x10] sm:$0xff]
        %v438 = vld [vmem:[%s434 + $0x18] sm:$0xff]
        %v439 = vld [vmem:[%s434 + $0x20] sm:$0xff]
        %v440 = vld [vmem:[%s434 + $0x28] sm:$0xff]
        %v441 = vld [vmem:[%s434 + $0x30] sm:$0xff]
        %v442 = vld [vmem:[%s434 + $0x38] sm:$0xff]
        %443 = vrot.lane.b32.xlu0 %v360, 120
        %v444 = vpop.permute.xlu0 %443
        %445 = vrot.lane.b32.xlu0 %v362, 120
        %v446 = vpop.permute.xlu0 %445
        %v447 = vsel %vm250, %v444, 0
        %v449 = vsel %vm250, %v446, 0
        %451 = vmatpush.msra.mxu0 0.0
        %452 = vmatpush.msra.mxu0 0.0
        %453 = vmatpush.msra.mxu0 0.0
        %454 = vmatpush.msra.mxu0 0.0
        %455 = vmatpush.msra.mxu0 0.0
        %456 = vmatpush.msra.mxu0 0.0
        %457 = vmatpush.msra.mxu0 0.0
        %458 = vmatpush.msra.mxu0 0.0
        %459 = vmatpush.msra.mxu0 %v442
        %460 = vmatpush.msra.mxu0 %v441
        %461 = vmatpush.msra.mxu0 %v440
        %462 = vmatpush.msra.mxu0 %v439
        %463 = vmatpush.msra.mxu0 %v438
        %464 = vmatpush.msra.mxu0 %v437
        %465 = vmatpush.msra.mxu0 %v436
        %466 = vmatpush.msra.mxu0 %v435
        %467 = vmatmul.f32.gmra.mxu0 %v447
        %v468 = vpop.f32.mrf.mxu0
        %v469 = vadd.f32 0.0, %v468
        %470 = vmatmul.f32.gmra.mxu0 %v449
        %v471 = vpop.f32.mrf.mxu0
        %v472 = vadd.f32 0.0, %v471
        %473 = vdwg.mxu0
        %v474 = vadd.f32 %v432, %v469
        %v475 = vadd.f32 %v433, %v472
        %s476 = scalar_lea.vmem [#allocation2], 384
        %v477 = vld [vmem:[%s476] sm:$0xff]
        %v478 = vld [vmem:[%s476 + $0x8] sm:$0xff]
        %v479 = vld [vmem:[%s476 + $0x10] sm:$0xff]
        %v480 = vld [vmem:[%s476 + $0x18] sm:$0xff]
        %v481 = vld [vmem:[%s476 + $0x20] sm:$0xff]
        %v482 = vld [vmem:[%s476 + $0x28] sm:$0xff]
        %v483 = vld [vmem:[%s476 + $0x30] sm:$0xff]
        %v484 = vld [vmem:[%s476 + $0x38] sm:$0xff]
        %vm485 = vcmask 1045504
        %v486 = vrot.slane %v224, 2
        %v487 = vrot.slane %v225, 2
        %v488 = vsel %vm485, %v486, %v487
        %v489 = vrot.slane %v226, 2
        %v490 = vsel %vm485, %v487, %v489
        %v491 = vsel %vm250, %v488, 0
        %v493 = vsel %vm250, %v490, 0
        %495 = vmatpush.msra.mxu0 0.0
        %496 = vmatpush.msra.mxu0 0.0
        %497 = vmatpush.msra.mxu0 0.0
        %498 = vmatpush.msra.mxu0 0.0
        %499 = vmatpush.msra.mxu0 0.0
        %500 = vmatpush.msra.mxu0 0.0
        %501 = vmatpush.msra.mxu0 0.0
        %502 = vmatpush.msra.mxu0 0.0
        %503 = vmatpush.msra.mxu0 %v484
        %504 = vmatpush.msra.mxu0 %v483
        %505 = vmatpush.msra.mxu0 %v482
        %506 = vmatpush.msra.mxu0 %v481
        %507 = vmatpush.msra.mxu0 %v480
        %508 = vmatpush.msra.mxu0 %v479
        %509 = vmatpush.msra.mxu0 %v478
        %510 = vmatpush.msra.mxu0 %v477
        %511 = vmatmul.f32.gmra.mxu0 %v491
        %v512 = vpop.f32.mrf.mxu0
        %v513 = vadd.f32 0.0, %v512
        %514 = vmatmul.f32.gmra.mxu0 %v493
        %v515 = vpop.f32.mrf.mxu0
        %v516 = vadd.f32 0.0, %v515
        %517 = vdwg.mxu0
        %v518 = vadd.f32 %v474, %v513
        %v519 = vadd.f32 %v475, %v516
        %s520 = scalar_lea.vmem [#allocation2], 448
        %v521 = vld [vmem:[%s520] sm:$0xff]
        %v522 = vld [vmem:[%s520 + $0x8] sm:$0xff]
        %v523 = vld [vmem:[%s520 + $0x10] sm:$0xff]
        %v524 = vld [vmem:[%s520 + $0x18] sm:$0xff]
        %v525 = vld [vmem:[%s520 + $0x20] sm:$0xff]
        %v526 = vld [vmem:[%s520 + $0x28] sm:$0xff]
        %v527 = vld [vmem:[%s520 + $0x30] sm:$0xff]
        %v528 = vld [vmem:[%s520 + $0x38] sm:$0xff]
        %529 = vrot.lane.b32.xlu0 %v488, 124
        %v530 = vpop.permute.xlu0 %529
        %531 = vrot.lane.b32.xlu0 %v490, 124
        %v532 = vpop.permute.xlu0 %531
        %v533 = vsel %vm250, %v530, 0
        %v535 = vsel %vm250, %v532, 0
        %537 = vmatpush.msra.mxu0 0.0
        %538 = vmatpush.msra.mxu0 0.0
        %539 = vmatpush.msra.mxu0 0.0
        %540 = vmatpush.msra.mxu0 0.0
        %541 = vmatpush.msra.mxu0 0.0
        %542 = vmatpush.msra.mxu0 0.0
        %543 = vmatpush.msra.mxu0 0.0
        %544 = vmatpush.msra.mxu0 0.0
        %545 = vmatpush.msra.mxu0 %v528
        %546 = vmatpush.msra.mxu0 %v527
        %547 = vmatpush.msra.mxu0 %v526
        %548 = vmatpush.msra.mxu0 %v525
        %549 = vmatpush.msra.mxu0 %v524
        %550 = vmatpush.msra.mxu0 %v523
        %551 = vmatpush.msra.mxu0 %v522
        %552 = vmatpush.msra.mxu0 %v521
        %553 = vmatmul.f32.gmra.mxu0 %v533
        %v554 = vpop.f32.mrf.mxu0
        %v555 = vadd.f32 0.0, %v554
        %556 = vmatmul.f32.gmra.mxu0 %v535
        %v557 = vpop.f32.mrf.mxu0
        %v558 = vadd.f32 0.0, %v557
        %559 = vdwg.mxu0
        %v560 = vadd.f32 %v518, %v555
        %v561 = vadd.f32 %v519, %v558
        %s562 = scalar_lea.vmem [#allocation2], 512
        %v563 = vld [vmem:[%s562] sm:$0xff]
        %v564 = vld [vmem:[%s562 + $0x8] sm:$0xff]
        %v565 = vld [vmem:[%s562 + $0x10] sm:$0xff]
        %v566 = vld [vmem:[%s562 + $0x18] sm:$0xff]
        %v567 = vld [vmem:[%s562 + $0x20] sm:$0xff]
        %v568 = vld [vmem:[%s562 + $0x28] sm:$0xff]
        %v569 = vld [vmem:[%s562 + $0x30] sm:$0xff]
        %v570 = vld [vmem:[%s562 + $0x38] sm:$0xff]
        %571 = vrot.lane.b32.xlu0 %v488, 120
        %v572 = vpop.permute.xlu0 %571
        %573 = vrot.lane.b32.xlu0 %v490, 120
        %v574 = vpop.permute.xlu0 %573
        %v575 = vsel %vm250, %v572, 0
        %v577 = vsel %vm250, %v574, 0
        %579 = vmatpush.msra.mxu0 0.0
        %580 = vmatpush.msra.mxu0 0.0
        %581 = vmatpush.msra.mxu0 0.0
        %582 = vmatpush.msra.mxu0 0.0
        %583 = vmatpush.msra.mxu0 0.0
        %584 = vmatpush.msra.mxu0 0.0
        %585 = vmatpush.msra.mxu0 0.0
        %586 = vmatpush.msra.mxu0 0.0
        %587 = vmatpush.msra.mxu0 %v570
        %588 = vmatpush.msra.mxu0 %v569
        %589 = vmatpush.msra.mxu0 %v568
        %590 = vmatpush.msra.mxu0 %v567
        %591 = vmatpush.msra.mxu0 %v566
        %592 = vmatpush.msra.mxu0 %v565
        %593 = vmatpush.msra.mxu0 %v564
        %594 = vmatpush.msra.mxu0 %v563
        %595 = vmatmul.f32.gmra.mxu0 %v575
        %v596 = vpop.f32.mrf.mxu0
        %v597 = vadd.f32 0.0, %v596
        %598 = vmatmul.f32.gmra.mxu0 %v577
        %v599 = vpop.f32.mrf.mxu0
        %v600 = vadd.f32 0.0, %v599
        %601 = vdwg.mxu0
        %v602 = vadd.f32 %v560, %v597
        %v603 = vadd.f32 %v561, %v600
        %604 = vst.msk [vmem:[%s211] sm:$0xff] %vm250, %v602
        %605 = vst.msk [vmem:[%s211 + $0x8] sm:$0xff] %vm250, %v603
        %v606 = vsel %vm250, %v602, 0.0
        %v607 = vsel %vm250, %v603, 0.0
        %v608 = vadd.f32 %v606, %v607
        %v609 = vrot.slane %v608, 4
        %v610 = vadd.f32 %v608, %v609
        %v611 = vrot.slane %v610, 2
        %v612 = vadd.f32 %v610, %v611
        %v613 = vrot.slane %v612, 1
        %v614 = vadd.f32 %v612, %v613
        %v615 = vmul.f32 %v602, %v602
        %v616 = vmul.f32 %v603, %v603
        %v617 = vsel %vm250, %v615, 0.0
        %v618 = vsel %vm250, %v616, 0.0
        %v619 = vadd.f32 %v617, %v618
        %v620 = vrot.slane %v619, 4
        %v621 = vadd.f32 %v619, %v620
        %v622 = vrot.slane %v621, 2
        %v623 = vadd.f32 %v621, %v622
        %v624 = vrot.slane %v623, 1
        %v625 = vadd.f32 %v623, %v624
        %v626 = vld [vmem:[%s2] sm:$0xff]
        %v627 = vld [vmem:[%s2 + $0x8] sm:$0xff]
        %v628 = vld [vmem:[%s2 + $0x10] sm:$0xff]
        %v629 = vld [vmem:[%s2 + $0x18] sm:$0xff]
        %v630 = vld [vmem:[%s2 + $0x20] sm:$0xff]
        %v631 = vld [vmem:[%s2 + $0x28] sm:$0xff]
        %v632 = vld [vmem:[%s2 + $0x30] sm:$0xff]
        %v633 = vld [vmem:[%s2 + $0x38] sm:$0xff]
        %v635 = vsel %vm250, %v614, 0
        %637 = vmatpush.msra.mxu0 0.0
        %638 = vmatpush.msra.mxu0 0.0
        %639 = vmatpush.msra.mxu0 0.0
        %640 = vmatpush.msra.mxu0 0.0
        %641 = vmatpush.msra.mxu0 0.0
        %642 = vmatpush.msra.mxu0 0.0
        %643 = vmatpush.msra.mxu0 0.0
        %644 = vmatpush.msra.mxu0 0.0
        %645 = vmatpush.msra.mxu0 %v633
        %646 = vmatpush.msra.mxu0 %v632
        %647 = vmatpush.msra.mxu0 %v631
        %648 = vmatpush.msra.mxu0 %v630
        %649 = vmatpush.msra.mxu0 %v629
        %650 = vmatpush.msra.mxu0 %v628
        %651 = vmatpush.msra.mxu0 %v627
        %652 = vmatpush.msra.mxu0 %v626
        %653 = vmatmul.f32.gmra.mxu0 %v635
        %v654 = vpop.f32.mrf.mxu0
        %v655 = vadd.f32 0.0, %v654
        %656 = vdwg.mxu0
        %v658 = vsel %vm250, %v625, 0
        %660 = vmatpush.msra.mxu0 0.0
        %661 = vmatpush.msra.mxu0 0.0
        %662 = vmatpush.msra.mxu0 0.0
        %663 = vmatpush.msra.mxu0 0.0
        %664 = vmatpush.msra.mxu0 0.0
        %665 = vmatpush.msra.mxu0 0.0
        %666 = vmatpush.msra.mxu0 0.0
        %667 = vmatpush.msra.mxu0 0.0
        %668 = vmatpush.msra.mxu0 %v633
        %669 = vmatpush.msra.mxu0 %v632
        %670 = vmatpush.msra.mxu0 %v631
        %671 = vmatpush.msra.mxu0 %v630
        %672 = vmatpush.msra.mxu0 %v629
        %673 = vmatpush.msra.mxu0 %v628
        %674 = vmatpush.msra.mxu0 %v627
        %675 = vmatpush.msra.mxu0 %v626
        %676 = vmatmul.f32.gmra.mxu0 %v658
        %v677 = vpop.f32.mrf.mxu0
        %v678 = vadd.f32 0.0, %v677
        %679 = vdwg.mxu0
        %v681 = vrot.slane %v678, 7
        %vm683 = vcmask 1040384
        %v684 = vsel %vm683, %v655, %v681
        %vm685 = vcmask 25600
        %686 = vst.msk [vmem:[%s218] sm:$0x3] %vm685, %v684
        %s687 = sand.u32 %s99, 1
        %s688 = scalar_lea.sflag [#allocation4], %s687
        %s689 = sand.u32 %s99, 1
        %s690 = smul.addr %s689, 16
        %s691 = scalar_lea.vmem [#allocation5], %s690
        %s692 = sand.u32 %s125, 1
        %s693 = scalar_lea.sflag [#allocation7], %s692
        %s694 = sand.u32 %s125, 1
        %s695 = smul.addr %s694, 2
        %s696 = scalar_lea.vmem [#allocation6], %s695
        // Predicated region
        $region37: #{tpu_custom_call.1} parent=31 // pred_check
          %p697 = pneg %p109
        $region38: #{tpu_custom_call.1} parent=31 // pred_check_branch
          %699 = sbr.rel (%p697) target = $region40
        $region39: #{tpu_custom_call.1} parent=31 // pred_region
          %701 = vsyncadd %s688, 0
          %s702 = smul.addr %s23, 2
          %s703 = smul.addr %s702, 8
          %s704 = scalar_lea.hbm %s3, %s703
          %s705 = sshll.u32 %s691, 4
          %s706 = int_to_ptr.vmem [resolvable:$true] %s705
          %s707 = sshll.u32 %s704, 4
          %s708 = int_to_ptr.hbm [resolvable:$true] %s707
          %713 = dma.vmem_to_hbm [thread:$0]  %s706, 256, %s708, %s688, 128, 128, 8
        $region40: #{tpu_custom_call.1} parent=31 // pred_fallthru
          _
        // Predicated region
        $region41: #{tpu_custom_call.1} parent=31 // pred_check
          %p714 = pneg %p135
        $region42: #{tpu_custom_call.1} parent=31 // pred_check_branch
          %716 = sbr.rel (%p714) target = $region44
        $region43: #{tpu_custom_call.1} parent=31 // pred_region
          %718 = vsyncadd %s693, 0
          %s719 = smul.addr %s23, 2
          %s720 = scalar_lea.hbm %s4, %s719
          %s722 = sshll.u32 %s696, 4
          %s723 = int_to_ptr.vmem [resolvable:$true] %s722
          %s724 = sshll.u32 %s720, 4
          %s725 = int_to_ptr.hbm [resolvable:$true] %s724
          %727 = dma.vmem_to_hbm [thread:$0]  %s723, 32, %s725, %s693
        $region44: #{tpu_custom_call.1} parent=31 // pred_fallthru
          _
      $region32: #{tpu_custom_call.1} parent=5 // pred_fallthru
        _
      %p728 = scmp.le.s32.totalorder 2, %s18
      // Predicated region
      $region45: #{tpu_custom_call.1} parent=5 // pred_check
        %p729 = pneg %p728
      $region46: #{tpu_custom_call.1} parent=5 // pred_check_branch
        %731 = sbr.rel (%p729) target = $region48
      $region47: #{tpu_custom_call.1} parent=5 // pred_region
        %s732 = ssub.s32 %s18, 2
        // Predicated region
        $region49: #{tpu_custom_call.1} parent=47 // pred_check
          %p733 = pneg %p115
        $region50: #{tpu_custom_call.1} parent=47 // pred_check_branch
          %735 = sbr.rel (%p733) target = $region52
        $region51: #{tpu_custom_call.1} parent=47 // pred_region
          %s736 = sand.u32 %s100, 1
          %s737 = scalar_lea.sflag [#allocation4], %s736
          %s738 = sand.u32 %s100, 1
          %s739 = smul.addr %s738, 16
          %s740 = scalar_lea.vmem [#allocation5], %s739
          %742 = dma.done %s737, 256
        $region52: #{tpu_custom_call.1} parent=47 // pred_fallthru
          _
        // Predicated region
        $region53: #{tpu_custom_call.1} parent=47 // pred_check
          %p743 = pneg %p141
        $region54: #{tpu_custom_call.1} parent=47 // pred_check_branch
          %745 = sbr.rel (%p743) target = $region56
        $region55: #{tpu_custom_call.1} parent=47 // pred_region
          %s746 = sand.u32 %s126, 1
          %s747 = scalar_lea.sflag [#allocation7], %s746
          %s748 = sand.u32 %s126, 1
          %s749 = smul.addr %s748, 2
          %s750 = scalar_lea.vmem [#allocation6], %s749
          %752 = dma.done %s747, 32
        $region56: #{tpu_custom_call.1} parent=47 // pred_fallthru
          _
      $region48: #{tpu_custom_call.1} parent=5 // pred_fallthru
        _
    $region6: #{tpu_custom_call.1} parent=1 // loop_footer
      %s22 = sadd.s32 1, %s18
    $region7: #{tpu_custom_call.1} parent=1 // loop_footer_branch
      %17 = sbr.rel target = $region3
    $region8: #{tpu_custom_call.1} parent=1 // loop_exit
      _
    %753 = vsyncpa [#allocation3], 1
    %s754 = scalar_lea.sflag [#allocation3], 1
    %755 = vsyncpa %s754, 1
    %756 = vsyncpa [#allocation4], 1
    %s757 = scalar_lea.sflag [#allocation4], 1
    %758 = vsyncpa %s757, 1
    %759 = vsyncpa [#allocation7], 1
    %s760 = scalar_lea.sflag [#allocation7], 1
    %761 = vsyncpa %s760, 1

</llo_original>
